<compile_context>
chip_gen: v7x
topology: tpu7x:2x2x1
jax: 0.10.0
libtpu: 0.0.40
codegen_flags: <defaults>
</compile_context>

<pallas_src>
import functools
import math

import jax
import jax.numpy as jnp
from jax.experimental import pallas as pl
from jax.experimental.pallas import tpu as pltpu


def _cdiv(a, b):
    return -(-a // b)


def _round_up(a, b):
    return _cdiv(a, b) * b


def _rbf_kernel(x_ref, e_ref, c_ref, o_ref, *, neg_gamma):
    """One lane-dense block of the RBF map.

    x_ref: (rows, G)      G consecutive flattened inputs per sublane row
    e_ref: (G, G*C)       constant 0/1 expansion matrix (VMEM-resident)
    c_ref: (1, G*C)       centers tiled G times (VMEM-resident)
    o_ref: (rows, G*C)    == `rows * G` consecutive rows of the (N, C) output
    """
    # MXU "repeat": x_exp[r, g*C + j] = x[r, g].  Keeps lanes 100% dense.
    x_exp = jnp.dot(x_ref[...], e_ref[...], preferred_element_type=jnp.float32)
    d = x_exp - c_ref[...]
    o_ref[...] = jnp.exp(neg_gamma * d * d).astype(o_ref.dtype)


def rbf_forward(x, centers, gamma, *, out_dtype=jnp.float32,
                target_block_bytes=5 * 1024 * 1024):
    """RBF forward: exp(-gamma * (x.reshape(-1, 1) - centers)^2).

    Args:
      x: any-shape array; flattened exactly like the PyTorch module.
      centers: 1-D array of RBF centers, shape (C,).
      gamma: python float, baked in at trace time.
        # TODO(synk): route gamma through an SMEM scalar if it must be traced.
      out_dtype: default float32 matches the module; pass jnp.bfloat16 to
        halve the dominant output HBM traffic if the consumer tolerates it.
      target_block_bytes: per-grid-step output block size to aim for.

    Returns:
      (N, C) array, N = x.size.
    """
    x_flat = jnp.ravel(x).astype(jnp.float32)
    n = x_flat.shape[0]
    centers = jnp.ravel(centers).astype(jnp.float32)
    c = centers.shape[0]

    # Group G inputs per output row so the block's last dim (G*C) is a
    # multiple of 128 lanes.  (C=20 -> G=32, G*C=640.)
    g = 128 // math.gcd(c, 128)
    gc = g * c

    # Pad N to a multiple of G only (no pad at all in the common case).
    n_pad = _round_up(n, g)
    if n_pad != n:
        x_flat = jnp.pad(x_flat, (0, n_pad - n))
    n_rows = n_pad // g
    x2d = jnp.reshape(x_flat, (n_rows, g))

    # Constant operands (constant index_map -> fetched once, kept resident).
    col_src = jnp.arange(gc, dtype=jnp.int32) // c                      # (GC,)
    e_mat = (col_src[None, :] ==
             jnp.arange(g, dtype=jnp.int32)[:, None]).astype(jnp.float32)
    c_row = jnp.reshape(jnp.tile(centers, g), (1, gc))

    # Block-row selection: aim for ~target_block_bytes of output per step,
    # keep >= 4 grid steps when the input is big enough (v7x megacore), never
    # drop below ~1/4 of the target (per-step pipeline overhead amortization),
    # sublane-aligned (multiple of 8) unless one block covers everything.
    out_bytes = jnp.dtype(out_dtype).itemsize
    rows_hi = max(8, (target_block_bytes // (gc * out_bytes)) // 8 * 8)
    rows_lo = min(rows_hi,
                  max(8, (target_block_bytes // 4 // (gc * out_bytes)) // 8 * 8))
    rows_4way = _round_up(_cdiv(n_rows, 4), 8)
    block_rows = min(rows_hi, max(rows_lo, rows_4way))
    if n_rows <= block_rows:
        block_rows = n_rows                      # single full-extent block
    n_blocks = _cdiv(n_rows, block_rows)

    cost = pl.CostEstimate(
        flops=2 * n_rows * g * gc + 3 * n_rows * gc,
        transcendentals=n_rows * gc,
        bytes_accessed=4 * n_rows * g + 4 * g * gc + 4 * gc
        + out_bytes * n_rows * gc,
    )

    out2d = pl.pallas_call(
        functools.partial(_rbf_kernel, neg_gamma=-float(gamma)),
        out_shape=jax.ShapeDtypeStruct((n_rows, gc), out_dtype),
        grid_spec=pltpu.PrefetchScalarGridSpec(
            num_scalar_prefetch=0,
            grid=(n_blocks,),
            in_specs=[
                pl.BlockSpec((block_rows, g), lambda i: (i, 0)),
                pl.BlockSpec((g, gc), lambda i: (0, 0)),
                pl.BlockSpec((1, gc), lambda i: (0, 0)),
            ],
            out_specs=pl.BlockSpec((block_rows, gc), lambda i: (i, 0)),
        ),
        compiler_params=pltpu.CompilerParams(
            dimension_semantics=("parallel",),
            vmem_limit_bytes=32 * 1024 * 1024,
        ),
        cost_estimate=cost,
    )(x2d, e_mat, c_row)

    # (n_rows, G*C) -> (n_pad, C) is a contiguity-preserving (free) reshape;
    # slice off the < G pad rows only when padding actually happened.
    out = jnp.reshape(out2d, (n_pad, c))
    if n_pad != n:
        out = out[:n]
    return out


if __name__ == "__main__":
    key = jax.random.PRNGKey(0)

    # Module parameters (mirrors RBF(centers=np.arange(0, 2, 0.1), gamma=10.0)).
    centers = jnp.arange(0.0, 2.0, 0.1, dtype=jnp.float32)   # C = 20
    gamma = 10.0

    def reference(xs):
        xs = jnp.reshape(xs, (-1, 1))
        return jnp.exp(-gamma * jnp.square(xs - jnp.reshape(centers, (1, -1))))

    # 1) Main check: batch of feature maps, N = 2*4*16*16 = 2048.
    x = jax.random.uniform(key, (2, 4, 16, 16), dtype=jnp.float32) * 2.0
    y = jax.block_until_ready(rbf_forward(x, centers, gamma))
    assert y.shape == (2048, 20)
    assert jnp.allclose(y, reference(x), atol=1e-6, rtol=1e-5)

    # 2) Ragged size (exercises the pad-to-G path): N = 3*111 = 333.
    x2 = jax.random.uniform(jax.random.PRNGKey(1), (3, 111),
                            dtype=jnp.float32) * 2.0
    y2 = jax.block_until_ready(rbf_forward(x2, centers, gamma))
    assert y2.shape == (333, 20)
    assert jnp.allclose(y2, reference(x2), atol=1e-6, rtol=1e-5)

    # 3) Multi-step grid with a clipped (ragged) edge block: N = 5*416 = 2080.
    x3 = jax.random.uniform(jax.random.PRNGKey(2), (5, 416),
                            dtype=jnp.float32) * 2.0
    y3 = jax.block_until_ready(
        rbf_forward(x3, centers, gamma, target_block_bytes=8192))
    assert y3.shape == (2080, 20)
    assert jnp.allclose(y3, reference(x3), atol=1e-6, rtol=1e-5)

    print("KERNEL_OK")
</pallas_src>

<mosaic_0001>
module attributes {stable_mosaic.version = 11 : i64} {
  func.func @_rbf_kernel(%arg0: i32, %arg1: memref<64x32xf32, #tpu.memory_space<vmem>>, %arg2: memref<32x640xf32, #tpu.memory_space<vmem>>, %arg3: memref<1x640xf32, #tpu.memory_space<vmem>>, %arg4: memref<64x640xf32, #tpu.memory_space<vmem>>) attributes {dimension_semantics = [#tpu.dimension_semantics<parallel>], iteration_bounds = array<i64: 1>, scalar_prefetch = 0 : i64, scratch_operands = 0 : i64, tpu.core_type = #tpu.core_type<tc>, window_params = [{transform_indices = @transform_0, window_bounds = array<i64: 64, 32>}, {pipeline_mode = #tpu.pipeline_mode<synchronous>, transform_indices = @transform_1, window_bounds = array<i64: 32, 640>}, {pipeline_mode = #tpu.pipeline_mode<synchronous>, transform_indices = @transform_2, window_bounds = array<i64: 1, 640>}, {transform_indices = @transform_3, window_bounds = array<i64: 64, 640>}]} {
    %c0 = arith.constant 0 : index
    %c0_0 = arith.constant 0 : index
    %0 = vector.load %arg1[%c0, %c0_0] : memref<64x32xf32, #tpu.memory_space<vmem>>, vector<64x32xf32>
    %c0_1 = arith.constant 0 : index
    %c0_2 = arith.constant 0 : index
    %1 = vector.load %arg2[%c0_1, %c0_2] : memref<32x640xf32, #tpu.memory_space<vmem>>, vector<32x640xf32>
    %cst = arith.constant dense<0.000000e+00> : vector<64x640xf32>
    %2 = tpu.matmul %0, %1, %cst {dimension_numbers = #tpu.dot_dimension_numbers<[1], [0], [0], [1], [0, 0, 1, 1], [], []>} : vector<64x32xf32>, vector<32x640xf32>, vector<64x640xf32> -> vector<64x640xf32>
    %c0_3 = arith.constant 0 : index
    %c0_4 = arith.constant 0 : index
    %3 = vector.load %arg3[%c0_3, %c0_4] : memref<1x640xf32, #tpu.memory_space<vmem>>, vector<1x640xf32>
    %4 = vector.broadcast %3 : vector<1x640xf32> to vector<64x640xf32>
    %5 = arith.subf %2, %4 : vector<64x640xf32>
    %cst_5 = arith.constant -1.000000e+01 : f32
    %6 = vector.broadcast %cst_5 : f32 to vector<64x640xf32>
    %7 = arith.mulf %6, %5 : vector<64x640xf32>
    %8 = arith.mulf %7, %5 : vector<64x640xf32>
    %9 = math.exp %8 : vector<64x640xf32>
    %c0_6 = arith.constant 0 : index
    %c0_7 = arith.constant 0 : index
    %10 = vector.load %arg4[%c0_6, %c0_7] : memref<64x640xf32, #tpu.memory_space<vmem>>, vector<64x640xf32>
    tpu.vector_store %arg4[%c0_6, %c0_7], %9 {strides = array<i32>} : memref<64x640xf32, #tpu.memory_space<vmem>>, vector<64x640xf32>,
    return
  }
  func.func @transform_0(%arg0: i32) -> (i32, i32) {
    %c0_i32 = arith.constant 0 : i32
    %c0_i32_0 = arith.constant 0 : i32
    return %arg0, %c0_i32 : i32, i32
  }
  func.func @transform_1(%arg0: i32) -> (i32, i32) {
    %c0_i32 = arith.constant 0 : i32
    %c0_i32_0 = arith.constant 0 : i32
    %c0_i32_1 = arith.constant 0 : i32
    return %c0_i32, %c0_i32_0 : i32, i32
  }
  func.func @transform_2(%arg0: i32) -> (i32, i32) {
    %c0_i32 = arith.constant 0 : i32
    %c0_i32_0 = arith.constant 0 : i32
    %c0_i32_1 = arith.constant 0 : i32
    return %c0_i32, %c0_i32_0 : i32, i32
  }
  func.func @transform_3(%arg0: i32) -> (i32, i32) {
    %c0_i32 = arith.constant 0 : i32
    %c0_i32_0 = arith.constant 0 : i32
    return %arg0, %c0_i32 : i32, i32
  }
}

</mosaic_0001>

<llo_original>
// kernel: tpu_custom_call.1
$region0: #{tpu_custom_call.1}
  #allocation0 [shape = 'u32[]', space=smem, size = 0x4, offset = 0x4, fixed_abs, tag = 'smem constant byte address 0x4 - core index']
  #allocation1 [shape = 'u32[144,128]{1,0:T(1,128)}', space=vmem, size = 0x12000, scoped, tag = 'internal scratch']
  %s0 = inlined_call_operand.vmem [shape: f32[64,32], index: 0, kind: input, shape index: {}]
  %s1 = inlined_call_operand.hbm [shape: f32[32,640], index: 1, kind: input, shape index: {}]
  %s2 = inlined_call_operand.vmem [shape: f32[1,640], index: 2, kind: input, shape index: {}]
  %s3 = inlined_call_operand.hbm [shape: f32[64,640], index: 3, kind: output, shape index: {}]
  %s4 = sld [smem:[#allocation0]]
  $region26: #{tpu_custom_call.1} parent=0
    _
  %s6 = ssub.s32 1, %s4
  %s7 = scalar_select 0, %s6, %s4
  $region1: #{tpu_custom_call.1} parent=0
    #allocation2 [shape = 'u8[81920]{0}', space=vmem, size = 0x14000, scoped, tag = 'input window, operand 1, single buffered']
    #allocation3 [shape = 's32[1]{0}', space=sflag, size = 0x4, scoped, tag = 'scoped memory for tpu_custom_call.1']
    #allocation4 [shape = 's32[1]{0}', space=sflag, size = 0x4, scoped, tag = 'scoped memory for tpu_custom_call.1']
    #allocation5 [shape = 'u8[163840]{0}', space=vmem, size = 0x28000, scoped, tag = 'output window, operand 0, single buffered']
    %8 = vsyncpa [#allocation3], 0
    %9 = vsyncpa [#allocation4], 0
    // Predicated region
    $region2: #{tpu_custom_call.1} parent=1 // pred_check
      _
    $region3: #{tpu_custom_call.1} parent=1 // pred_check_branch
      %11 = sbr.rel (0) target = $region5
    $region4: #{tpu_custom_call.1} parent=1 // pred_region
      _
    $region5: #{tpu_custom_call.1} parent=1 // pred_fallthru
      _
    // Predicated region
    $region6: #{tpu_custom_call.1} parent=1 // pred_check
      _
    $region7: #{tpu_custom_call.1} parent=1 // pred_check_branch
      %13 = sbr.rel (0) target = $region9
    $region8: #{tpu_custom_call.1} parent=1 // pred_region
      %s15 = ssub.s32 2560, 2560
      %16 = vsyncadd [#allocation3], %s15
      %s17 = sshll.u32 [#allocation2], 4
      %s18 = int_to_ptr.vmem [resolvable:$true] %s17
      %23 = dma.hbm_to_vmem [thread:$0]  %s1, 2560, %s18, [#allocation3], 640, 640, 40
    $region9: #{tpu_custom_call.1} parent=1 // pred_fallthru
      _
    // Predicated region
    $region10: #{tpu_custom_call.1} parent=1 // pred_check
      _
    $region11: #{tpu_custom_call.1} parent=1 // pred_check_branch
      %25 = sbr.rel (0) target = $region13
    $region12: #{tpu_custom_call.1} parent=1 // pred_region
      _
    $region13: #{tpu_custom_call.1} parent=1 // pred_fallthru
      _
    // Predicated region
    $region14: #{tpu_custom_call.1} parent=1 // pred_check
      _
    $region15: #{tpu_custom_call.1} parent=1 // pred_check_branch
      %27 = sbr.rel (0) target = $region17
    $region16: #{tpu_custom_call.1} parent=1 // pred_region
      %28 = dma.done [#allocation3], 2560
    $region17: #{tpu_custom_call.1} parent=1 // pred_fallthru
      _
    %v29 = vld [vmem:[%s0] sm:$0xff]
    %v30 = vld [vmem:[%s0 + $0x8] sm:$0xff]
    %v31 = vld [vmem:[%s0 + $0x10] sm:$0xff]
    %v32 = vld [vmem:[%s0 + $0x18] sm:$0xff]
    %v33 = vld [vmem:[%s0 + $0x20] sm:$0xff]
    %v34 = vld [vmem:[%s0 + $0x28] sm:$0xff]
    %v35 = vld [vmem:[%s0 + $0x30] sm:$0xff]
    %v36 = vld [vmem:[%s0 + $0x38] sm:$0xff]
    %v37 = vld [vmem:[#allocation2] sm:$0xff]
    %v38 = vld [vmem:[#allocation2 + $0x8] sm:$0xff]
    %v39 = vld [vmem:[#allocation2 + $0x10] sm:$0xff]
    %v40 = vld [vmem:[#allocation2 + $0x18] sm:$0xff]
    %v41 = vld [vmem:[#allocation2 + $0x20] sm:$0xff]
    %v42 = vld [vmem:[#allocation2 + $0x28] sm:$0xff]
    %v43 = vld [vmem:[#allocation2 + $0x30] sm:$0xff]
    %v44 = vld [vmem:[#allocation2 + $0x38] sm:$0xff]
    %v45 = vld [vmem:[#allocation2 + $0x40] sm:$0xff]
    %v46 = vld [vmem:[#allocation2 + $0x48] sm:$0xff]
    %v47 = vld [vmem:[#allocation2 + $0x50] sm:$0xff]
    %v48 = vld [vmem:[#allocation2 + $0x58] sm:$0xff]
    %v49 = vld [vmem:[#allocation2 + $0x60] sm:$0xff]
    %v50 = vld [vmem:[#allocation2 + $0x68] sm:$0xff]
    %v51 = vld [vmem:[#allocation2 + $0x70] sm:$0xff]
    %v52 = vld [vmem:[#allocation2 + $0x78] sm:$0xff]
    %v53 = vld [vmem:[#allocation2 + $0x80] sm:$0xff]
    %v54 = vld [vmem:[#allocation2 + $0x88] sm:$0xff]
    %v55 = vld [vmem:[#allocation2 + $0x90] sm:$0xff]
    %v56 = vld [vmem:[#allocation2 + $0x98] sm:$0xff]
    %vm57 = vcmask 261120
    %v59 = vsel %vm57, %v29, 0
    %v62 = vsel %vm57, %v30, 0
    %v65 = vsel %vm57, %v31, 0
    %v68 = vsel %vm57, %v32, 0
    %v71 = vsel %vm57, %v33, 0
    %v74 = vsel %vm57, %v34, 0
    %v77 = vsel %vm57, %v35, 0
    %v80 = vsel %vm57, %v36, 0
    %82 = vmatprep.subr.mxu0 %v38
    %83 = vmatpush1.msra.mxu0 %v37
    %84 = vmatprep.subr.mxu0 %v43
    %85 = vmatpush1.msra.mxu0 %v42
    %86 = vmatprep.subr.mxu0 %v48
    %87 = vmatpush1.msra.mxu0 %v47
    %88 = vmatprep.subr.mxu0 %v53
    %89 = vmatpush1.msra.mxu0 %v52
    %90 = vmatprep.subr.mxu0 0.0
    %91 = vmatpush1.msra.mxu0 0.0
    %92 = vmatprep.subr.mxu0 0.0
    %93 = vmatpush1.msra.mxu0 0.0
    %94 = vmatprep.subr.mxu0 0.0
    %95 = vmatpush1.msra.mxu0 0.0
    %96 = vmatprep.subr.mxu0 0.0
    %97 = vmatpush1.msra.mxu0 0.0
    %98 = vmatprep.subr.mxu0 0.0
    %99 = vmatpush1.msra.mxu0 0.0
    %100 = vmatprep.subr.mxu0 0.0
    %101 = vmatpush1.msra.mxu0 0.0
    %102 = vmatprep.subr.mxu0 0.0
    %103 = vmatpush1.msra.mxu0 0.0
    %104 = vmatprep.subr.mxu0 0.0
    %105 = vmatpush1.msra.mxu0 0.0
    %106 = vmatprep.subr.mxu0 0.0
    %107 = vmatpush1.msra.mxu0 0.0
    %108 = vmatprep.subr.mxu0 0.0
    %109 = vmatpush1.msra.mxu0 0.0
    %110 = vmatprep.subr.mxu0 0.0
    %111 = vmatpush1.msra.mxu0 0.0
    %112 = vmatprep.subr.mxu0 0.0
    %113 = vmatpush1.msra.mxu0 0.0
    %114 = vmatprep.subr.mxu0 0.0
    %115 = vmatpush1.msra.mxu0 0.0
    %116 = vmatprep.subr.mxu0 0.0
    %117 = vmatpush1.msra.mxu0 0.0
    %118 = vmatprep.subr.mxu0 0.0
    %119 = vmatpush1.msra.mxu0 0.0
    %120 = vmatprep.subr.mxu0 0.0
    %121 = vmatpush1.msra.mxu0 0.0
    %122 = vmatprep.subr.mxu0 0.0
    %123 = vmatpush1.msra.mxu0 0.0
    %124 = vmatprep.subr.mxu0 0.0
    %125 = vmatpush1.msra.mxu0 0.0
    %126 = vmatprep.subr.mxu0 0.0
    %127 = vmatpush1.msra.mxu0 0.0
    %128 = vmatprep.subr.mxu0 0.0
    %129 = vmatpush1.msra.mxu0 0.0
    %130 = vmatprep.subr.mxu0 0.0
    %131 = vmatpush1.msra.mxu0 0.0
    %132 = vmatprep.subr.mxu0 0.0
    %133 = vmatpush1.msra.mxu0 0.0
    %134 = vmatprep.subr.mxu0 0.0
    %135 = vmatpush1.msra.mxu0 0.0
    %136 = vmatprep.subr.mxu0 0.0
    %137 = vmatpush1.msra.mxu0 0.0
    %138 = vmatprep.subr.mxu0 0.0
    %139 = vmatpush1.msra.mxu0 0.0
    %140 = vmatprep.subr.mxu0 0.0
    %141 = vmatpush1.msra.mxu0 0.0
    %142 = vmatprep.subr.mxu0 0.0
    %143 = vmatpush1.msra.mxu0 0.0
    %144 = vmatprep.subr.mxu0 0.0
    %145 = vmatpush1.msra.mxu0 0.0
    %146 = vmatprep.mubr.f32.mxu0 0.0
    %147 = vmatmul.mubr.f32.gmra.mrb[0].mxu0 %v59
    %v148 = vpop.f32.mrb[0].mxu0
    %v149 = vadd.f32 0.0, %v148
    %v150 = vpop.f32.mrb[0].mxu0
    %v151 = vadd.f32 0.0, %v150
    %152 = vmatprep.mubr.f32.mxu0 0.0
    %153 = vmatmul.mubr.f32.gmra.mrb[0].mxu0 %v62
    %v154 = vpop.f32.mrb[0].mxu0
    %v155 = vadd.f32 0.0, %v154
    %v156 = vpop.f32.mrb[0].mxu0
    %v157 = vadd.f32 0.0, %v156
    %158 = vmatprep.mubr.f32.mxu0 0.0
    %159 = vmatmul.mubr.f32.gmra.mrb[0].mxu0 %v65
    %v160 = vpop.f32.mrb[0].mxu0
    %v161 = vadd.f32 0.0, %v160
    %v162 = vpop.f32.mrb[0].mxu0
    %v163 = vadd.f32 0.0, %v162
    %164 = vmatprep.mubr.f32.mxu0 0.0
    %165 = vmatmul.mubr.f32.gmra.mrb[0].mxu0 %v68
    %v166 = vpop.f32.mrb[0].mxu0
    %v167 = vadd.f32 0.0, %v166
    %v168 = vpop.f32.mrb[0].mxu0
    %v169 = vadd.f32 0.0, %v168
    %170 = vmatprep.mubr.f32.mxu0 0.0
    %171 = vmatmul.mubr.f32.gmra.mrb[0].mxu0 %v71
    %v172 = vpop.f32.mrb[0].mxu0
    %v173 = vadd.f32 0.0, %v172
    %v174 = vpop.f32.mrb[0].mxu0
    %v175 = vadd.f32 0.0, %v174
    %176 = vmatprep.mubr.f32.mxu0 0.0
    %177 = vmatmul.mubr.f32.gmra.mrb[0].mxu0 %v74
    %v178 = vpop.f32.mrb[0].mxu0
    %v179 = vadd.f32 0.0, %v178
    %v180 = vpop.f32.mrb[0].mxu0
    %v181 = vadd.f32 0.0, %v180
    %182 = vmatprep.mubr.f32.mxu0 0.0
    %183 = vmatmul.mubr.f32.gmra.mrb[0].mxu0 %v77
    %v184 = vpop.f32.mrb[0].mxu0
    %v185 = vadd.f32 0.0, %v184
    %v186 = vpop.f32.mrb[0].mxu0
    %v187 = vadd.f32 0.0, %v186
    %188 = vmatprep.mubr.f32.mxu0 0.0
    %189 = vmatmul.mubr.f32.gmra.mrb[0].mxu0 %v80
    %v190 = vpop.f32.mrb[0].mxu0
    %v191 = vadd.f32 0.0, %v190
    %v192 = vpop.f32.mrb[0].mxu0
    %v193 = vadd.f32 0.0, %v192
    %194 = vdwg.mxu0
    %195 = vmatprep.subr.mxu0 %v40
    %196 = vmatpush1.msra.mxu0 %v39
    %197 = vmatprep.subr.mxu0 %v45
    %198 = vmatpush1.msra.mxu0 %v44
    %199 = vmatprep.subr.mxu0 %v50
    %200 = vmatpush1.msra.mxu0 %v49
    %201 = vmatprep.subr.mxu0 %v55
    %202 = vmatpush1.msra.mxu0 %v54
    %203 = vmatprep.subr.mxu0 0.0
    %204 = vmatpush1.msra.mxu0 0.0
    %205 = vmatprep.subr.mxu0 0.0
    %206 = vmatpush1.msra.mxu0 0.0
    %207 = vmatprep.subr.mxu0 0.0
    %208 = vmatpush1.msra.mxu0 0.0
    %209 = vmatprep.subr.mxu0 0.0
    %210 = vmatpush1.msra.mxu0 0.0
    %211 = vmatprep.subr.mxu0 0.0
    %212 = vmatpush1.msra.mxu0 0.0
    %213 = vmatprep.subr.mxu0 0.0
    %214 = vmatpush1.msra.mxu0 0.0
    %215 = vmatprep.subr.mxu0 0.0
    %216 = vmatpush1.msra.mxu0 0.0
    %217 = vmatprep.subr.mxu0 0.0
    %218 = vmatpush1.msra.mxu0 0.0
    %219 = vmatprep.subr.mxu0 0.0
    %220 = vmatpush1.msra.mxu0 0.0
    %221 = vmatprep.subr.mxu0 0.0
    %222 = vmatpush1.msra.mxu0 0.0
    %223 = vmatprep.subr.mxu0 0.0
    %224 = vmatpush1.msra.mxu0 0.0
    %225 = vmatprep.subr.mxu0 0.0
    %226 = vmatpush1.msra.mxu0 0.0
    %227 = vmatprep.subr.mxu0 0.0
    %228 = vmatpush1.msra.mxu0 0.0
    %229 = vmatprep.subr.mxu0 0.0
    %230 = vmatpush1.msra.mxu0 0.0
    %231 = vmatprep.subr.mxu0 0.0
    %232 = vmatpush1.msra.mxu0 0.0
    %233 = vmatprep.subr.mxu0 0.0
    %234 = vmatpush1.msra.mxu0 0.0
    %235 = vmatprep.subr.mxu0 0.0
    %236 = vmatpush1.msra.mxu0 0.0
    %237 = vmatprep.subr.mxu0 0.0
    %238 = vmatpush1.msra.mxu0 0.0
    %239 = vmatprep.subr.mxu0 0.0
    %240 = vmatpush1.msra.mxu0 0.0
    %241 = vmatprep.subr.mxu0 0.0
    %242 = vmatpush1.msra.mxu0 0.0
    %243 = vmatprep.subr.mxu0 0.0
    %244 = vmatpush1.msra.mxu0 0.0
    %245 = vmatprep.subr.mxu0 0.0
    %246 = vmatpush1.msra.mxu0 0.0
    %247 = vmatprep.subr.mxu0 0.0
    %248 = vmatpush1.msra.mxu0 0.0
    %249 = vmatprep.subr.mxu0 0.0
    %250 = vmatpush1.msra.mxu0 0.0
    %251 = vmatprep.subr.mxu0 0.0
    %252 = vmatpush1.msra.mxu0 0.0
    %253 = vmatprep.subr.mxu0 0.0
    %254 = vmatpush1.msra.mxu0 0.0
    %255 = vmatprep.subr.mxu0 0.0
    %256 = vmatpush1.msra.mxu0 0.0
    %257 = vmatprep.subr.mxu0 0.0
    %258 = vmatpush1.msra.mxu0 0.0
    %259 = vmatprep.mubr.f32.mxu0 0.0
    %260 = vmatmul.mubr.f32.gmra.mrb[0].mxu0 %v59
    %v261 = vpop.f32.mrb[0].mxu0
    %v262 = vadd.f32 0.0, %v261
    %v263 = vpop.f32.mrb[0].mxu0
    %v264 = vadd.f32 0.0, %v263
    %265 = vmatprep.mubr.f32.mxu0 0.0
    %266 = vmatmul.mubr.f32.gmra.mrb[0].mxu0 %v62
    %v267 = vpop.f32.mrb[0].mxu0
    %v268 = vadd.f32 0.0, %v267
    %v269 = vpop.f32.mrb[0].mxu0
    %v270 = vadd.f32 0.0, %v269
    %271 = vmatprep.mubr.f32.mxu0 0.0
    %272 = vmatmul.mubr.f32.gmra.mrb[0].mxu0 %v65
    %v273 = vpop.f32.mrb[0].mxu0
    %v274 = vadd.f32 0.0, %v273
    %v275 = vpop.f32.mrb[0].mxu0
    %v276 = vadd.f32 0.0, %v275
    %277 = vmatprep.mubr.f32.mxu0 0.0
    %278 = vmatmul.mubr.f32.gmra.mrb[0].mxu0 %v68
    %v279 = vpop.f32.mrb[0].mxu0
    %v280 = vadd.f32 0.0, %v279
    %v281 = vpop.f32.mrb[0].mxu0
    %v282 = vadd.f32 0.0, %v281
    %283 = vmatprep.mubr.f32.mxu0 0.0
    %284 = vmatmul.mubr.f32.gmra.mrb[0].mxu0 %v71
    %v285 = vpop.f32.mrb[0].mxu0
    %v286 = vadd.f32 0.0, %v285
    %v287 = vpop.f32.mrb[0].mxu0
    %v288 = vadd.f32 0.0, %v287
    %289 = vmatprep.mubr.f32.mxu0 0.0
    %290 = vmatmul.mubr.f32.gmra.mrb[0].mxu0 %v74
    %v291 = vpop.f32.mrb[0].mxu0
    %v292 = vadd.f32 0.0, %v291
    %v293 = vpop.f32.mrb[0].mxu0
    %v294 = vadd.f32 0.0, %v293
    %295 = vmatprep.mubr.f32.mxu0 0.0
    %296 = vmatmul.mubr.f32.gmra.mrb[0].mxu0 %v77
    %v297 = vpop.f32.mrb[0].mxu0
    %v298 = vadd.f32 0.0, %v297
    %v299 = vpop.f32.mrb[0].mxu0
    %v300 = vadd.f32 0.0, %v299
    %301 = vmatprep.mubr.f32.mxu0 0.0
    %302 = vmatmul.mubr.f32.gmra.mrb[0].mxu0 %v80
    %v303 = vpop.f32.mrb[0].mxu0
    %v304 = vadd.f32 0.0, %v303
    %v305 = vpop.f32.mrb[0].mxu0
    %v306 = vadd.f32 0.0, %v305
    %307 = vdwg.mxu0
    %308 = vmatprep.subr.mxu0 0.0
    %309 = vmatpush1.msra.mxu0 %v41
    %310 = vmatprep.subr.mxu0 0.0
    %311 = vmatpush1.msra.mxu0 %v46
    %312 = vmatprep.subr.mxu0 0.0
    %313 = vmatpush1.msra.mxu0 %v51
    %314 = vmatprep.subr.mxu0 0.0
    %315 = vmatpush1.msra.mxu0 %v56
    %316 = vmatprep.subr.mxu0 0.0
    %317 = vmatpush1.msra.mxu0 0.0
    %318 = vmatprep.subr.mxu0 0.0
    %319 = vmatpush1.msra.mxu0 0.0
    %320 = vmatprep.subr.mxu0 0.0
    %321 = vmatpush1.msra.mxu0 0.0
    %322 = vmatprep.subr.mxu0 0.0
    %323 = vmatpush1.msra.mxu0 0.0
    %324 = vmatprep.subr.mxu0 0.0
    %325 = vmatpush1.msra.mxu0 0.0
    %326 = vmatprep.subr.mxu0 0.0
    %327 = vmatpush1.msra.mxu0 0.0
    %328 = vmatprep.subr.mxu0 0.0
    %329 = vmatpush1.msra.mxu0 0.0
    %330 = vmatprep.subr.mxu0 0.0
    %331 = vmatpush1.msra.mxu0 0.0
    %332 = vmatprep.subr.mxu0 0.0
    %333 = vmatpush1.msra.mxu0 0.0
    %334 = vmatprep.subr.mxu0 0.0
    %335 = vmatpush1.msra.mxu0 0.0
    %336 = vmatprep.subr.mxu0 0.0
    %337 = vmatpush1.msra.mxu0 0.0
    %338 = vmatprep.subr.mxu0 0.0
    %339 = vmatpush1.msra.mxu0 0.0
    %340 = vmatprep.subr.mxu0 0.0
    %341 = vmatpush1.msra.mxu0 0.0
    %342 = vmatprep.subr.mxu0 0.0
    %343 = vmatpush1.msra.mxu0 0.0
    %344 = vmatprep.subr.mxu0 0.0
    %345 = vmatpush1.msra.mxu0 0.0
    %346 = vmatprep.subr.mxu0 0.0
    %347 = vmatpush1.msra.mxu0 0.0
    %348 = vmatprep.subr.mxu0 0.0
    %349 = vmatpush1.msra.mxu0 0.0
    %350 = vmatprep.subr.mxu0 0.0
    %351 = vmatpush1.msra.mxu0 0.0
    %352 = vmatprep.subr.mxu0 0.0
    %353 = vmatpush1.msra.mxu0 0.0
    %354 = vmatprep.subr.mxu0 0.0
    %355 = vmatpush1.msra.mxu0 0.0
    %356 = vmatprep.subr.mxu0 0.0
    %357 = vmatpush1.msra.mxu0 0.0
    %358 = vmatprep.subr.mxu0 0.0
    %359 = vmatpush1.msra.mxu0 0.0
    %360 = vmatprep.subr.mxu0 0.0
    %361 = vmatpush1.msra.mxu0 0.0
    %362 = vmatprep.subr.mxu0 0.0
    %363 = vmatpush1.msra.mxu0 0.0
    %364 = vmatprep.subr.mxu0 0.0
    %365 = vmatpush1.msra.mxu0 0.0
    %366 = vmatprep.subr.mxu0 0.0
    %367 = vmatpush1.msra.mxu0 0.0
    %368 = vmatprep.subr.mxu0 0.0
    %369 = vmatpush1.msra.mxu0 0.0
    %370 = vmatprep.subr.mxu0 0.0
    %371 = vmatpush1.msra.mxu0 0.0
    %372 = vmatprep.mubr.f32.mxu0 0.0
    %373 = vmatmul.mubr.f32.gmra.mrb[0].mxu0 %v59
    %v374 = vpop.f32.mrb[0].mxu0
    %v375 = vadd.f32 0.0, %v374
    %v376 = vpop.f32.mrb[0].mxu0
    %377 = vmatprep.mubr.f32.mxu0 0.0
    %378 = vmatmul.mubr.f32.gmra.mrb[0].mxu0 %v62
    %v379 = vpop.f32.mrb[0].mxu0
    %v380 = vadd.f32 0.0, %v379
    %v381 = vpop.f32.mrb[0].mxu0
    %382 = vmatprep.mubr.f32.mxu0 0.0
    %383 = vmatmul.mubr.f32.gmra.mrb[0].mxu0 %v65
    %v384 = vpop.f32.mrb[0].mxu0
    %v385 = vadd.f32 0.0, %v384
    %v386 = vpop.f32.mrb[0].mxu0
    %387 = vmatprep.mubr.f32.mxu0 0.0
    %388 = vmatmul.mubr.f32.gmra.mrb[0].mxu0 %v68
    %v389 = vpop.f32.mrb[0].mxu0
    %v390 = vadd.f32 0.0, %v389
    %v391 = vpop.f32.mrb[0].mxu0
    %392 = vmatprep.mubr.f32.mxu0 0.0
    %393 = vmatmul.mubr.f32.gmra.mrb[0].mxu0 %v71
    %v394 = vpop.f32.mrb[0].mxu0
    %v395 = vadd.f32 0.0, %v394
    %v396 = vpop.f32.mrb[0].mxu0
    %397 = vmatprep.mubr.f32.mxu0 0.0
    %398 = vmatmul.mubr.f32.gmra.mrb[0].mxu0 %v74
    %v399 = vpop.f32.mrb[0].mxu0
    %v400 = vadd.f32 0.0, %v399
    %v401 = vpop.f32.mrb[0].mxu0
    %402 = vmatprep.mubr.f32.mxu0 0.0
    %403 = vmatmul.mubr.f32.gmra.mrb[0].mxu0 %v77
    %v404 = vpop.f32.mrb[0].mxu0
    %v405 = vadd.f32 0.0, %v404
    %v406 = vpop.f32.mrb[0].mxu0
    %407 = vmatprep.mubr.f32.mxu0 0.0
    %408 = vmatmul.mubr.f32.gmra.mrb[0].mxu0 %v80
    %v409 = vpop.f32.mrb[0].mxu0
    %v410 = vadd.f32 0.0, %v409
    %v411 = vpop.f32.mrb[0].mxu0
    %412 = vdwg.mxu0
    %v413 = vld [vmem:[%s2] sm:$0x1f]
    %v415 = vlaneseq
    %v416 = vshrl.u32 %v415, 7
    %v417 = vsub.s32 0, %v416
    %v418 = vrot.slane %v413, %v417
    %v419 = vlaneseq
    %v420 = vshrl.u32 %v419, 7
    %v421 = vsub.s32 1, %v420
    %v422 = vrot.slane %v413, %v421
    %v423 = vlaneseq
    %v424 = vshrl.u32 %v423, 7
    %v425 = vsub.s32 2, %v424
    %v426 = vrot.slane %v413, %v425
    %v427 = vlaneseq
    %v428 = vshrl.u32 %v427, 7
    %v429 = vsub.s32 3, %v428
    %v430 = vrot.slane %v413, %v429
    %v431 = vlaneseq
    %v432 = vshrl.u32 %v431, 7
    %v433 = vsub.s32 4, %v432
    %v434 = vrot.slane %v413, %v433
    %v440 = vsub.f32 %v149, %v418
    %v441 = vsub.f32 %v151, %v422
    %v442 = vsub.f32 %v262, %v426
    %v443 = vsub.f32 %v264, %v430
    %v444 = vsub.f32 %v375, %v434
    %v445 = vsub.f32 %v155, %v418
    %v446 = vsub.f32 %v157, %v422
    %v447 = vsub.f32 %v268, %v426
    %v448 = vsub.f32 %v270, %v430
    %v449 = vsub.f32 %v380, %v434
    %v450 = vsub.f32 %v161, %v418
    %v451 = vsub.f32 %v163, %v422
    %v452 = vsub.f32 %v274, %v426
    %v453 = vsub.f32 %v276, %v430
    %v454 = vsub.f32 %v385, %v434
    %v455 = vsub.f32 %v167, %v418
    %v456 = vsub.f32 %v169, %v422
    %v457 = vsub.f32 %v280, %v426
    %v458 = vsub.f32 %v282, %v430
    %v459 = vsub.f32 %v390, %v434
    %v460 = vsub.f32 %v173, %v418
    %v461 = vsub.f32 %v175, %v422
    %v462 = vsub.f32 %v286, %v426
    %v463 = vsub.f32 %v288, %v430
    %v464 = vsub.f32 %v395, %v434
    %v465 = vsub.f32 %v179, %v418
    %v466 = vsub.f32 %v181, %v422
    %v467 = vsub.f32 %v292, %v426
    %v468 = vsub.f32 %v294, %v430
    %v469 = vsub.f32 %v400, %v434
    %v470 = vsub.f32 %v185, %v418
    %v471 = vsub.f32 %v187, %v422
    %v472 = vsub.f32 %v298, %v426
    %v473 = vsub.f32 %v300, %v430
    %v474 = vsub.f32 %v405, %v434
    %v475 = vsub.f32 %v191, %v418
    %v476 = vsub.f32 %v193, %v422
    %v477 = vsub.f32 %v304, %v426
    %v478 = vsub.f32 %v306, %v430
    %v479 = vsub.f32 %v410, %v434
    %v480 = vmul.f32 %v440, -10.0
    %v481 = vmul.f32 %v441, -10.0
    %v482 = vmul.f32 %v442, -10.0
    %v483 = vmul.f32 %v443, -10.0
    %v484 = vmul.f32 %v444, -10.0
    %v485 = vmul.f32 %v445, -10.0
    %v486 = vmul.f32 %v446, -10.0
    %v487 = vmul.f32 %v447, -10.0
    %v488 = vmul.f32 %v448, -10.0
    %v489 = vmul.f32 %v449, -10.0
    %v490 = vmul.f32 %v450, -10.0
    %v491 = vmul.f32 %v451, -10.0
    %v492 = vmul.f32 %v452, -10.0
    %v493 = vmul.f32 %v453, -10.0
    %v494 = vmul.f32 %v454, -10.0
    %v495 = vmul.f32 %v455, -10.0
    %v496 = vmul.f32 %v456, -10.0
    %v497 = vmul.f32 %v457, -10.0
    %v498 = vmul.f32 %v458, -10.0
    %v499 = vmul.f32 %v459, -10.0
    %v500 = vmul.f32 %v460, -10.0
    %v501 = vmul.f32 %v461, -10.0
    %v502 = vmul.f32 %v462, -10.0
    %v503 = vmul.f32 %v463, -10.0
    %v504 = vmul.f32 %v464, -10.0
    %v505 = vmul.f32 %v465, -10.0
    %v506 = vmul.f32 %v466, -10.0
    %v507 = vmul.f32 %v467, -10.0
    %v508 = vmul.f32 %v468, -10.0
    %v509 = vmul.f32 %v469, -10.0
    %v510 = vmul.f32 %v470, -10.0
    %v511 = vmul.f32 %v471, -10.0
    %v512 = vmul.f32 %v472, -10.0
    %v513 = vmul.f32 %v473, -10.0
    %v514 = vmul.f32 %v474, -10.0
    %v515 = vmul.f32 %v475, -10.0
    %v516 = vmul.f32 %v476, -10.0
    %v517 = vmul.f32 %v477, -10.0
    %v518 = vmul.f32 %v478, -10.0
    %v519 = vmul.f32 %v479, -10.0
    %v520 = vmul.f32 %v480, %v440
    %v521 = vmul.f32 %v481, %v441
    %v522 = vmul.f32 %v482, %v442
    %v523 = vmul.f32 %v483, %v443
    %v524 = vmul.f32 %v484, %v444
    %v525 = vmul.f32 %v485, %v445
    %v526 = vmul.f32 %v486, %v446
    %v527 = vmul.f32 %v487, %v447
    %v528 = vmul.f32 %v488, %v448
    %v529 = vmul.f32 %v489, %v449
    %v530 = vmul.f32 %v490, %v450
    %v531 = vmul.f32 %v491, %v451
    %v532 = vmul.f32 %v492, %v452
    %v533 = vmul.f32 %v493, %v453
    %v534 = vmul.f32 %v494, %v454
    %v535 = vmul.f32 %v495, %v455
    %v536 = vmul.f32 %v496, %v456
    %v537 = vmul.f32 %v497, %v457
    %v538 = vmul.f32 %v498, %v458
    %v539 = vmul.f32 %v499, %v459
    %v540 = vmul.f32 %v500, %v460
    %v541 = vmul.f32 %v501, %v461
    %v542 = vmul.f32 %v502, %v462
    %v543 = vmul.f32 %v503, %v463
    %v544 = vmul.f32 %v504, %v464
    %v545 = vmul.f32 %v505, %v465
    %v546 = vmul.f32 %v506, %v466
    %v547 = vmul.f32 %v507, %v467
    %v548 = vmul.f32 %v508, %v468
    %v549 = vmul.f32 %v509, %v469
    %v550 = vmul.f32 %v510, %v470
    %v551 = vmul.f32 %v511, %v471
    %v552 = vmul.f32 %v512, %v472
    %v553 = vmul.f32 %v513, %v473
    %v554 = vmul.f32 %v514, %v474
    %v555 = vmul.f32 %v515, %v475
    %v556 = vmul.f32 %v516, %v476
    %v557 = vmul.f32 %v517, %v477
    %v558 = vmul.f32 %v518, %v478
    %v559 = vmul.f32 %v519, %v479
    %v560 = vmul.f32 %v520, 1.442695
    %v561 = vpow.pop %v560
    %v562 = vmul.f32 %v521, 1.442695
    %v563 = vpow.pop %v562
    %v564 = vmul.f32 %v522, 1.442695
    %v565 = vpow.pop %v564
    %v566 = vmul.f32 %v523, 1.442695
    %v567 = vpow.pop %v566
    %v568 = vmul.f32 %v524, 1.442695
    %v569 = vpow.pop %v568
    %v570 = vmul.f32 %v525, 1.442695
    %v571 = vpow.pop %v570
    %v572 = vmul.f32 %v526, 1.442695
    %v573 = vpow.pop %v572
    %v574 = vmul.f32 %v527, 1.442695
    %v575 = vpow.pop %v574
    %v576 = vmul.f32 %v528, 1.442695
    %v577 = vpow.pop %v576
    %v578 = vmul.f32 %v529, 1.442695
    %v579 = vpow.pop %v578
    %v580 = vmul.f32 %v530, 1.442695
    %v581 = vpow.pop %v580
    %v582 = vmul.f32 %v531, 1.442695
    %v583 = vpow.pop %v582
    %v584 = vmul.f32 %v532, 1.442695
    %v585 = vpow.pop %v584
    %v586 = vmul.f32 %v533, 1.442695
    %v587 = vpow.pop %v586
    %v588 = vmul.f32 %v534, 1.442695
    %v589 = vpow.pop %v588
    %v590 = vmul.f32 %v535, 1.442695
    %v591 = vpow.pop %v590
    %v592 = vmul.f32 %v536, 1.442695
    %v593 = vpow.pop %v592
    %v594 = vmul.f32 %v537, 1.442695
    %v595 = vpow.pop %v594
    %v596 = vmul.f32 %v538, 1.442695
    %v597 = vpow.pop %v596
    %v598 = vmul.f32 %v539, 1.442695
    %v599 = vpow.pop %v598
    %v600 = vmul.f32 %v540, 1.442695
    %v601 = vpow.pop %v600
    %v602 = vmul.f32 %v541, 1.442695
    %v603 = vpow.pop %v602
    %v604 = vmul.f32 %v542, 1.442695
    %v605 = vpow.pop %v604
    %v606 = vmul.f32 %v543, 1.442695
    %v607 = vpow.pop %v606
    %v608 = vmul.f32 %v544, 1.442695
    %v609 = vpow.pop %v608
    %v610 = vmul.f32 %v545, 1.442695
    %v611 = vpow.pop %v610
    %v612 = vmul.f32 %v546, 1.442695
    %v613 = vpow.pop %v612
    %v614 = vmul.f32 %v547, 1.442695
    %v615 = vpow.pop %v614
    %v616 = vmul.f32 %v548, 1.442695
    %v617 = vpow.pop %v616
    %v618 = vmul.f32 %v549, 1.442695
    %v619 = vpow.pop %v618
    %v620 = vmul.f32 %v550, 1.442695
    %v621 = vpow.pop %v620
    %v622 = vmul.f32 %v551, 1.442695
    %v623 = vpow.pop %v622
    %v624 = vmul.f32 %v552, 1.442695
    %v625 = vpow.pop %v624
    %v626 = vmul.f32 %v553, 1.442695
    %v627 = vpow.pop %v626
    %v628 = vmul.f32 %v554, 1.442695
    %v629 = vpow.pop %v628
    %v630 = vmul.f32 %v555, 1.442695
    %v631 = vpow.pop %v630
    %v632 = vmul.f32 %v556, 1.442695
    %v633 = vpow.pop %v632
    %v634 = vmul.f32 %v557, 1.442695
    %v635 = vpow.pop %v634
    %v636 = vmul.f32 %v558, 1.442695
    %v637 = vpow.pop %v636
    %v638 = vmul.f32 %v559, 1.442695
    %v639 = vpow.pop %v638
    %640 = vst [vmem:[#allocation5] sm:$0xff] %v561
    %641 = vst [vmem:[#allocation5 + $0x8] sm:$0xff] %v563
    %642 = vst [vmem:[#allocation5 + $0x10] sm:$0xff] %v565
    %643 = vst [vmem:[#allocation5 + $0x18] sm:$0xff] %v567
    %644 = vst [vmem:[#allocation5 + $0x20] sm:$0xff] %v569
    %645 = vst [vmem:[#allocation5 + $0x28] sm:$0xff] %v571
    %646 = vst [vmem:[#allocation5 + $0x30] sm:$0xff] %v573
    %647 = vst [vmem:[#allocation5 + $0x38] sm:$0xff] %v575
    %648 = vst [vmem:[#allocation5 + $0x40] sm:$0xff] %v577
    %649 = vst [vmem:[#allocation5 + $0x48] sm:$0xff] %v579
    %650 = vst [vmem:[#allocation5 + $0x50] sm:$0xff] %v581
    %651 = vst [vmem:[#allocation5 + $0x58] sm:$0xff] %v583
    %652 = vst [vmem:[#allocation5 + $0x60] sm:$0xff] %v585
    %653 = vst [vmem:[#allocation5 + $0x68] sm:$0xff] %v587
    %654 = vst [vmem:[#allocation5 + $0x70] sm:$0xff] %v589
    %655 = vst [vmem:[#allocation5 + $0x78] sm:$0xff] %v591
    %656 = vst [vmem:[#allocation5 + $0x80] sm:$0xff] %v593
    %657 = vst [vmem:[#allocation5 + $0x88] sm:$0xff] %v595
    %658 = vst [vmem:[#allocation5 + $0x90] sm:$0xff] %v597
    %659 = vst [vmem:[#allocation5 + $0x98] sm:$0xff] %v599
    %660 = vst [vmem:[#allocation5 + $0xa0] sm:$0xff] %v601
    %661 = vst [vmem:[#allocation5 + $0xa8] sm:$0xff] %v603
    %662 = vst [vmem:[#allocation5 + $0xb0] sm:$0xff] %v605
    %663 = vst [vmem:[#allocation5 + $0xb8] sm:$0xff] %v607
    %664 = vst [vmem:[#allocation5 + $0xc0] sm:$0xff] %v609
    %665 = vst [vmem:[#allocation5 + $0xc8] sm:$0xff] %v611
    %666 = vst [vmem:[#allocation5 + $0xd0] sm:$0xff] %v613
    %667 = vst [vmem:[#allocation5 + $0xd8] sm:$0xff] %v615
    %668 = vst [vmem:[#allocation5 + $0xe0] sm:$0xff] %v617
    %669 = vst [vmem:[#allocation5 + $0xe8] sm:$0xff] %v619
    %670 = vst [vmem:[#allocation5 + $0xf0] sm:$0xff] %v621
    %671 = vst [vmem:[#allocation5 + $0xf8] sm:$0xff] %v623
    %672 = vst [vmem:[#allocation5 + $0x100] sm:$0xff] %v625
    %673 = vst [vmem:[#allocation5 + $0x108] sm:$0xff] %v627
    %674 = vst [vmem:[#allocation5 + $0x110] sm:$0xff] %v629
    %675 = vst [vmem:[#allocation5 + $0x118] sm:$0xff] %v631
    %676 = vst [vmem:[#allocation5 + $0x120] sm:$0xff] %v633
    %677 = vst [vmem:[#allocation5 + $0x128] sm:$0xff] %v635
    %678 = vst [vmem:[#allocation5 + $0x130] sm:$0xff] %v637
    %679 = vst [vmem:[#allocation5 + $0x138] sm:$0xff] %v639
    // Predicated region
    $region18: #{tpu_custom_call.1} parent=1 // pred_check
      _
    $region19: #{tpu_custom_call.1} parent=1 // pred_check_branch
      %681 = sbr.rel (0) target = $region21
    $region20: #{tpu_custom_call.1} parent=1 // pred_region
      %s683 = ssub.s32 5120, 5120
      %684 = vsyncadd [#allocation4], %s683
      %s685 = sshll.u32 [#allocation5], 4
      %s686 = int_to_ptr.vmem [resolvable:$true] %s685
      %691 = dma.vmem_to_hbm [thread:$0]  %s686, 5120, %s3, [#allocation4], 640, 640, 40
    $region21: #{tpu_custom_call.1} parent=1 // pred_fallthru
      _
    // Predicated region
    $region22: #{tpu_custom_call.1} parent=1 // pred_check
      _
    $region23: #{tpu_custom_call.1} parent=1 // pred_check_branch
      %693 = sbr.rel (0) target = $region25
    $region24: #{tpu_custom_call.1} parent=1 // pred_region
      %694 = dma.done [#allocation4], 5120
    $region25: #{tpu_custom_call.1} parent=1 // pred_fallthru
      _
    %695 = vsyncpa [#allocation3], 1
    %696 = vsyncpa [#allocation4], 1

</llo_original>
